<compile_context>
chip_gen: v5e
topology: v5e:2x2
jax: 0.10.0
libtpu: 0.0.40
codegen_flags: <defaults>
</compile_context>

<pallas_src>
import jax
import jax.numpy as jnp
from jax.experimental import pallas as pl
from jax.experimental.pallas import tpu as pltpu


def _pseudonet_kernel(pts_ref, o_ref):
    # Scalar hot path on the scalar ALU: x, y = pts; out = (6 + 2*y) * x^2 + y
    x = pts_ref[0]
    y = pts_ref[1]
    o_ref[0] = (6.0 + 2.0 * y) * x * x + y


def pseudonet_forward(pts: jax.Array) -> jax.Array:
    """pts: [2] -> [1], matching PseudoNet.forward().

    NOTE: where a Pallas kernel is not mandated, inlining the jnp expression
    `(6 + 2*y) * x*x + y` into the caller's jit is strictly faster (no
    custom-call boundary); this wrapper keeps the minimal gridless SMEM form
    for the case where a Pallas implementation is required.
    """
    orig_dtype = pts.dtype
    # SMEM scalar refs are a 32-bit path: upcast sub-32-bit inputs, compute in
    # f32, and narrow the (1,) result back at the end.  No-op for f32.
    compute_dtype = jnp.float32 if orig_dtype != jnp.float32 else orig_dtype
    pts_f32 = pts.astype(compute_dtype)

    out = pl.pallas_call(
        _pseudonet_kernel,
        out_shape=jax.ShapeDtypeStruct((1,), compute_dtype),
        in_specs=[pl.BlockSpec(memory_space=pltpu.MemorySpace.SMEM)],
        out_specs=pl.BlockSpec(memory_space=pltpu.MemorySpace.SMEM),
        # Honest cost: 5 flops, 12 bytes (2 x f32 in + 1 x f32 out), no
        # transcendentals.  Do not inflate — it would only serialize neighbors.
        cost_estimate=pl.CostEstimate(
            flops=5, transcendentals=0, bytes_accessed=12
        ),
    )(pts_f32)

    return out.astype(orig_dtype)


def pseudonet_reference(pts: jax.Array) -> jax.Array:
    x, y = pts[0], pts[1]
    return ((6.0 + 2.0 * y) * x**2 + y).reshape(1)


if __name__ == "__main__":
    # Deterministic parameter init.  torch.zeros((2,)) would make the result
    # trivially 0, so PRNGKey(0) normals exercise the arithmetic; the kernel
    # matches the module exactly for any pts.
    key = jax.random.PRNGKey(0)
    pts = jax.random.normal(key, (2,), dtype=jnp.float32)

    out = pseudonet_forward(pts)
    out = jax.block_until_ready(out)

    ref = pseudonet_reference(pts)
    assert out.shape == (1,), f"bad shape {out.shape}"
    assert out.dtype == jnp.float32, f"bad dtype {out.dtype}"
    assert jnp.allclose(out, ref, rtol=1e-6, atol=1e-6), (out, ref)

    # Exercise the sub-32-bit guard path as well (upcast -> compute -> narrow).
    pts_bf16 = pts.astype(jnp.bfloat16)
    out_bf16 = jax.block_until_ready(pseudonet_forward(pts_bf16))
    assert out_bf16.shape == (1,) and out_bf16.dtype == jnp.bfloat16
    assert jnp.allclose(
        out_bf16.astype(jnp.float32),
        pseudonet_reference(pts_bf16.astype(jnp.float32)),
        rtol=2e-2, atol=2e-2,
    ), (out_bf16, pts_bf16)

    print("KERNEL_OK")
</pallas_src>

<mosaic_0001>
module attributes {stable_mosaic.version = 11 : i64} {
  func.func @_pseudonet_kernel(%arg0: memref<2xf32, #tpu.memory_space<smem>>, %arg1: memref<1xf32, #tpu.memory_space<smem>>) attributes {dimension_semantics = [], scalar_prefetch = 0 : i64, scratch_operands = 0 : i64, tpu.core_type = #tpu.core_type<tc>} {
    %c0 = arith.constant 0 : index
    %0 = memref.load %arg0[%c0] : memref<2xf32, #tpu.memory_space<smem>>
    %c1 = arith.constant 1 : index
    %1 = memref.load %arg0[%c1] : memref<2xf32, #tpu.memory_space<smem>>
    %cst = arith.constant 2.000000e+00 : f32
    %2 = arith.mulf %cst, %1 : f32
    %cst_0 = arith.constant 6.000000e+00 : f32
    %3 = arith.addf %cst_0, %2 : f32
    %4 = arith.mulf %3, %0 : f32
    %5 = arith.mulf %4, %0 : f32
    %6 = arith.addf %5, %1 : f32
    %c0_1 = arith.constant 0 : index
    %7 = memref.load %arg1[%c0_1] : memref<1xf32, #tpu.memory_space<smem>>
    memref.store %6, %arg1[%c0_1] : memref<1xf32, #tpu.memory_space<smem>>
    return
  }
}

</mosaic_0001>

<llo_original>
// kernel: tpu_custom_call.1
$region0: #{tpu_custom_call.1}
  #allocation0 [shape = 'u32[]', space=smem, size = 0x4, offset = 0x4, fixed_abs, tag = 'smem constant byte address 0x4 - core index']
  #allocation1 [shape = 'u32[72,128]{1,0:T(1,128)}', space=vmem, size = 0x9000, scoped, tag = 'internal scratch']
  %s0 = inlined_call_operand.hbm [shape: f32[2], index: 0, kind: input, shape index: {}]
  %s1 = inlined_call_operand.hbm [shape: f32[1], index: 1, kind: output, shape index: {}]
  %s2 = sld [smem:[#allocation0]]
  $region18: #{tpu_custom_call.1} parent=0
    _
  %s4 = ssub.s32 1, %s2
  %s5 = scalar_select 0, %s4, %s2
  $region1: #{tpu_custom_call.1} parent=0
    #allocation2 [shape = 'u8[512]{0}', space=smem, size = 0x200, scoped, tag = 'input window, operand 0, single buffered']
    #allocation3 [shape = 's32[1]{0}', space=sflag, size = 0x4, scoped, tag = 'scoped memory for tpu_custom_call.1']
    #allocation4 [shape = 's32[1]{0}', space=sflag, size = 0x4, scoped, tag = 'scoped memory for tpu_custom_call.1']
    #allocation5 [shape = 'u8[512]{0}', space=smem, size = 0x200, scoped, tag = 'output window, operand 0, single buffered']
    %6 = vsyncpa [#allocation3], 0
    %7 = vsyncpa [#allocation4], 0
    // Predicated region
    $region2: #{tpu_custom_call.1} parent=1 // pred_check
      _
    $region3: #{tpu_custom_call.1} parent=1 // pred_check_branch
      %9 = sbr.rel (0) target = $region5
    $region4: #{tpu_custom_call.1} parent=1 // pred_region
      %11 = vsyncadd [#allocation3], 0
      %s13 = sshll.u32 %s0, 4
      %s14 = int_to_ptr.hbm [resolvable:$true] %s13
      %16 = dma.hbm_to_smem %s14, 16, [#allocation2], [#allocation3]
    $region5: #{tpu_custom_call.1} parent=1 // pred_fallthru
      _
    // Predicated region
    $region6: #{tpu_custom_call.1} parent=1 // pred_check
      _
    $region7: #{tpu_custom_call.1} parent=1 // pred_check_branch
      %18 = sbr.rel (0) target = $region9
    $region8: #{tpu_custom_call.1} parent=1 // pred_region
      %20 = dma.done [#allocation3], 16
    $region9: #{tpu_custom_call.1} parent=1 // pred_fallthru
      _
    %21 = sfence
    %s22 = sld [smem:[#allocation2]]
    %s23 = sld [smem:[#allocation2 + $0x1]]
    %s24 = smul.f32 %s23, 2.0
    %s25 = sadd.f32 %s24, 6.0
    %s26 = smul.f32 %s25, %s22
    %s27 = smul.f32 %s26, %s22
    %s28 = sadd.f32 %s27, %s23
    %s29 = scalar_lea.smem [#allocation5], 0
    %30 = sst [smem:[%s29]] %s28
    // Predicated region
    $region10: #{tpu_custom_call.1} parent=1 // pred_check
      _
    $region11: #{tpu_custom_call.1} parent=1 // pred_check_branch
      %32 = sbr.rel (0) target = $region13
    $region12: #{tpu_custom_call.1} parent=1 // pred_region
      %34 = vsyncadd [#allocation4], 0
      %s36 = sshll.u32 %s1, 4
      %s37 = int_to_ptr.hbm [resolvable:$true] %s36
      %39 = dma.smem_to_hbm [#allocation5], 16, %s37, [#allocation4]
    $region13: #{tpu_custom_call.1} parent=1 // pred_fallthru
      _
    // Predicated region
    $region14: #{tpu_custom_call.1} parent=1 // pred_check
      _
    $region15: #{tpu_custom_call.1} parent=1 // pred_check_branch
      %41 = sbr.rel (0) target = $region17
    $region16: #{tpu_custom_call.1} parent=1 // pred_region
      %43 = dma.done [#allocation4], 16
    $region17: #{tpu_custom_call.1} parent=1 // pred_fallthru
      _
    %44 = sfence
    %45 = vsyncpa [#allocation3], 1
    %46 = vsyncpa [#allocation4], 1

</llo_original>
